<compile_context>
chip_gen: v6e
topology: v6e:2x2x1
jax: 0.10.0
libtpu: 0.0.40
codegen_flags: <defaults>
</compile_context>

<pallas_src>
import jax
import jax.numpy as jnp
from jax import lax
from jax.experimental import pallas as pl
from jax.experimental.pallas import tpu as pltpu

# ---- small config consistent with the module ----
VOCAB = 128          # cfg['vocab_size']
EMB = 32             # cfg['emb_dim']
CTX = 16             # cfg['context_length']
N_LAYERS = 2         # cfg['n_layers'] (DummyTransformerBlock == identity)
DROP_RATE = 0.1      # cfg['drop_rate'] (identity in eval)
BATCH = 2
SEQ = 8

_HIGHEST = lax.Precision.HIGHEST


def gpt_kernel(ids_ref, tok_tab_ref, pos_ref, w_t_ref, out_ref):
    """Single-shot kernel: whole logits block in one pass.

    ids_ref     : VMEM (ROWS, 1)     int32  flattened token ids (row-major b*S+s)
    tok_tab_ref : VMEM (VOCAB, EMB)  f32    full token-embedding table
    pos_tab_ref : VMEM (ROWS, EMB)   f32    positional rows, pre-broadcast per row
    w_t_ref     : VMEM (EMB, VOCAB)  f32    LM-head weight, pre-transposed
    out_ref     : VMEM (ROWS, VOCAB) f32    logits
    """
    rows = ids_ref.shape[0]
    vocab = tok_tab_ref.shape[0]

    # --- token embedding gather as a one-hot MXU matmul (no scalar loop) ---
    ids = ids_ref[...]                                            # (rows, 1) i32
    tok_iota = lax.broadcasted_iota(jnp.int32, (rows, vocab), 1)
    tok_onehot = (ids == tok_iota).astype(jnp.float32)            # (rows, vocab)
    tok_x = jnp.dot(tok_onehot, tok_tab_ref[...],
                    precision=_HIGHEST,
                    preferred_element_type=jnp.float32)           # (rows, emb)

    # --- add pre-broadcast positional embedding (pure VPU add) ---
    x = tok_x + pos_ref[...]
    # drop_emb / DummyTransformerBlock / DummyLayerNorm are identity in this
    # forward (eval-mode dropout, dummy blocks), so nothing to compute.

    # --- LM head: x (rows, emb) @ w^T (emb, vocab) -> lane-dense (rows, vocab) ---
    out_ref[...] = jnp.dot(x, w_t_ref[...],
                           precision=_HIGHEST,
                           preferred_element_type=jnp.float32)    # (rows, vocab)


def gpt_forward(in_idx, tok_emb, pos_emb, out_head_w):
    """in_idx: (B, S) int32; returns logits (B, S, VOCAB) f32."""
    b, s = in_idx.shape
    rows = b * s
    vocab = tok_emb.shape[0]

    ids_2d = in_idx.reshape(rows, 1).astype(jnp.int32)
    # pos_emb(arange(s)) broadcast over batch, flattened row-major (b*S+s).
    pos_rows = jnp.tile(pos_emb[:s], (b, 1))                      # (rows, EMB)
    # LM-head weight pre-transposed (tiny constant; folded under jit).
    w_t = out_head_w.T                                            # (EMB, VOCAB)

    logits_flat = pl.pallas_call(
        gpt_kernel,
        out_shape=jax.ShapeDtypeStruct((rows, vocab), jnp.float32),
        in_specs=[
            pl.BlockSpec(memory_space=pltpu.MemorySpace.VMEM),  # ids
            pl.BlockSpec(memory_space=pltpu.MemorySpace.VMEM),  # token table
            pl.BlockSpec(memory_space=pltpu.MemorySpace.VMEM),  # positional rows
            pl.BlockSpec(memory_space=pltpu.MemorySpace.VMEM),  # LM-head weight^T
        ],
        out_specs=pl.BlockSpec(memory_space=pltpu.MemorySpace.VMEM),
    )(ids_2d, tok_emb, pos_rows, w_t)

    return logits_flat.reshape(b, s, vocab)


if __name__ == "__main__":
    key = jax.random.PRNGKey(0)
    k_tok, k_pos, k_w, k_ids = jax.random.split(key, 4)

    # Deterministic synthetic parameters (nn.Embedding ~ N(0,1); Linear ~ small uniform).
    tok_emb = jax.random.normal(k_tok, (VOCAB, EMB), dtype=jnp.float32)
    pos_emb = jax.random.normal(k_pos, (CTX, EMB), dtype=jnp.float32)
    out_head_w = jax.random.uniform(
        k_w, (VOCAB, EMB), dtype=jnp.float32,
        minval=-1.0 / jnp.sqrt(EMB), maxval=1.0 / jnp.sqrt(EMB)
    )

    in_idx = jax.random.randint(k_ids, (BATCH, SEQ), 0, VOCAB, dtype=jnp.int32)

    logits = gpt_forward(in_idx, tok_emb, pos_emb, out_head_w)
    logits = jax.block_until_ready(logits)

    # Pure-JAX reference for sanity (same full-f32 matmul precision).
    x_ref = tok_emb[in_idx] + pos_emb[jnp.arange(SEQ)][None, :, :]
    ref = jnp.matmul(x_ref, out_head_w.T, precision=lax.Precision.HIGHEST)
    assert logits.shape == (BATCH, SEQ, VOCAB)
    assert jnp.allclose(logits, ref, atol=1e-5, rtol=1e-5)

    print("KERNEL_OK")
</pallas_src>

<mosaic_0001>
module attributes {stable_mosaic.version = 11 : i64} {
  func.func @gpt_kernel(%arg0: memref<16x1xi32, #tpu.memory_space<vmem>>, %arg1: memref<128x32xf32, #tpu.memory_space<vmem>>, %arg2: memref<16x32xf32, #tpu.memory_space<vmem>>, %arg3: memref<32x128xf32, #tpu.memory_space<vmem>>, %arg4: memref<16x128xf32, #tpu.memory_space<vmem>>) attributes {dimension_semantics = [], scalar_prefetch = 0 : i64, scratch_operands = 0 : i64, tpu.core_type = #tpu.core_type<tc>} {
    %c0 = arith.constant 0 : index
    %c0_0 = arith.constant 0 : index
    %0 = vector.load %arg0[%c0, %c0_0] : memref<16x1xi32, #tpu.memory_space<vmem>>, vector<16x1xi32>
    %1 = tpu.iota {dimensions = array<i32: 1>} : vector<16x128xi32>
    %2 = vector.broadcast %0 : vector<16x1xi32> to vector<16x128xi32>
    %3 = arith.cmpi eq, %2, %1 : vector<16x128xi32>
    %4 = arith.extui %3 : vector<16x128xi1> to vector<16x128xi32>
    %5 = arith.sitofp %4 : vector<16x128xi32> to vector<16x128xf32>
    %c0_1 = arith.constant 0 : index
    %c0_2 = arith.constant 0 : index
    %6 = vector.load %arg1[%c0_1, %c0_2] : memref<128x32xf32, #tpu.memory_space<vmem>>, vector<128x32xf32>
    %cst = arith.constant dense<0.000000e+00> : vector<16x32xf32>
    %7 = tpu.matmul %5, %6, %cst {dimension_numbers = #tpu.dot_dimension_numbers<[1], [0], [0], [1], [0, 0, 1, 1], [], []>, precision = #tpu.contract_precision<fp32>} : vector<16x128xf32>, vector<128x32xf32>, vector<16x32xf32> -> vector<16x32xf32>
    %c0_3 = arith.constant 0 : index
    %c0_4 = arith.constant 0 : index
    %8 = vector.load %arg2[%c0_3, %c0_4] : memref<16x32xf32, #tpu.memory_space<vmem>>, vector<16x32xf32>
    %9 = arith.addf %7, %8 : vector<16x32xf32>
    %c0_5 = arith.constant 0 : index
    %c0_6 = arith.constant 0 : index
    %10 = vector.load %arg3[%c0_5, %c0_6] : memref<32x128xf32, #tpu.memory_space<vmem>>, vector<32x128xf32>
    %cst_7 = arith.constant dense<0.000000e+00> : vector<16x128xf32>
    %11 = tpu.matmul %9, %10, %cst_7 {dimension_numbers = #tpu.dot_dimension_numbers<[1], [0], [0], [1], [0, 0, 1, 1], [], []>, precision = #tpu.contract_precision<fp32>} : vector<16x32xf32>, vector<32x128xf32>, vector<16x128xf32> -> vector<16x128xf32>
    %c0_8 = arith.constant 0 : index
    %c0_9 = arith.constant 0 : index
    %12 = vector.load %arg4[%c0_8, %c0_9] : memref<16x128xf32, #tpu.memory_space<vmem>>, vector<16x128xf32>
    tpu.vector_store %arg4[%c0_8, %c0_9], %11 {strides = array<i32>} : memref<16x128xf32, #tpu.memory_space<vmem>>, vector<16x128xf32>,
    return
  }
}

</mosaic_0001>

<llo_original>
// kernel: tpu_custom_call.1
$region0: #{tpu_custom_call.1}
  #allocation0 [shape = 'u32[]', space=smem, size = 0x4, offset = 0x4, fixed_abs, tag = 'smem constant byte address 0x4 - core index']
  #allocation1 [shape = 'u32[144,128]{1,0:T(1,128)}', space=vmem, size = 0x12000, scoped, tag = 'internal scratch']
  %s0 = inlined_call_operand.vmem [shape: s32[16,1], index: 0, kind: input, shape index: {}]
  %s1 = inlined_call_operand.vmem [shape: f32[128,32], index: 1, kind: input, shape index: {}]
  %s2 = inlined_call_operand.vmem [shape: f32[16,32], index: 2, kind: input, shape index: {}]
  %s3 = inlined_call_operand.vmem [shape: f32[32,128], index: 3, kind: input, shape index: {}]
  %s4 = inlined_call_operand.hbm [shape: f32[16,128], index: 4, kind: output, shape index: {}]
  %s5 = sld [smem:[#allocation0]]
  $region26: #{tpu_custom_call.1} parent=0
    _
  %s7 = ssub.s32 1, %s5
  %s8 = scalar_select 0, %s7, %s5
  $region1: #{tpu_custom_call.1} parent=0
    #allocation2 [shape = 'u8[8192]{0}', space=vmem, size = 0x2000, scoped, tag = 'output window, operand 0, single buffered']
    #allocation3 [shape = 's32[1]{0}', space=sflag, size = 0x4, scoped, tag = 'scoped memory for tpu_custom_call.1']
    %9 = vsyncpa [#allocation3], 0
    // Predicated region
    $region2: #{tpu_custom_call.1} parent=1 // pred_check
      _
    $region3: #{tpu_custom_call.1} parent=1 // pred_check_branch
      %11 = sbr.rel (0) target = $region5
    $region4: #{tpu_custom_call.1} parent=1 // pred_region
      _
    $region5: #{tpu_custom_call.1} parent=1 // pred_fallthru
      _
    // Predicated region
    $region6: #{tpu_custom_call.1} parent=1 // pred_check
      _
    $region7: #{tpu_custom_call.1} parent=1 // pred_check_branch
      %13 = sbr.rel (0) target = $region9
    $region8: #{tpu_custom_call.1} parent=1 // pred_region
      _
    $region9: #{tpu_custom_call.1} parent=1 // pred_fallthru
      _
    // Predicated region
    $region10: #{tpu_custom_call.1} parent=1 // pred_check
      _
    $region11: #{tpu_custom_call.1} parent=1 // pred_check_branch
      %15 = sbr.rel (0) target = $region13
    $region12: #{tpu_custom_call.1} parent=1 // pred_region
      _
    $region13: #{tpu_custom_call.1} parent=1 // pred_fallthru
      _
    // Predicated region
    $region14: #{tpu_custom_call.1} parent=1 // pred_check
      _
    $region15: #{tpu_custom_call.1} parent=1 // pred_check_branch
      %17 = sbr.rel (0) target = $region17
    $region16: #{tpu_custom_call.1} parent=1 // pred_region
      _
    $region17: #{tpu_custom_call.1} parent=1 // pred_fallthru
      _
    %v18 = vld [vmem:[%s0] sm:$0xff]
    %v19 = vld [vmem:[%s0 + $0x8] sm:$0xff]
    %v20 = vlaneseq
    %v21 = vand.u32 %v20, 127
    %22 = vset.pattern.permute.xlu0 0
    %23 = vperm.xlu0 %22, %v18
    %v24 = vpop.permute.xlu0 %23
    %25 = vset.pattern.permute.xlu0 0
    %26 = vperm.xlu0 %25, %v19
    %v27 = vpop.permute.xlu0 %26
    %vm28 = vcmp.eq.s32.totalorder %v24, %v21
    %vm29 = vcmp.eq.s32.totalorder %v27, %v21
    %v30 = vsel %vm28, 1, 0
    %v31 = vsel %vm29, 1, 0
    %v32 = vcvt.s32.f32 %v30
    %v33 = vcvt.s32.f32 %v31
    %v34 = vld [vmem:[%s1] sm:$0xff]
    %v35 = vld [vmem:[%s1 + $0x8] sm:$0xff]
    %v36 = vld [vmem:[%s1 + $0x10] sm:$0xff]
    %v37 = vld [vmem:[%s1 + $0x18] sm:$0xff]
    %v38 = vld [vmem:[%s1 + $0x20] sm:$0xff]
    %v39 = vld [vmem:[%s1 + $0x28] sm:$0xff]
    %v40 = vld [vmem:[%s1 + $0x30] sm:$0xff]
    %v41 = vld [vmem:[%s1 + $0x38] sm:$0xff]
    %v42 = vld [vmem:[%s1 + $0x40] sm:$0xff]
    %v43 = vld [vmem:[%s1 + $0x48] sm:$0xff]
    %v44 = vld [vmem:[%s1 + $0x50] sm:$0xff]
    %v45 = vld [vmem:[%s1 + $0x58] sm:$0xff]
    %v46 = vld [vmem:[%s1 + $0x60] sm:$0xff]
    %v47 = vld [vmem:[%s1 + $0x68] sm:$0xff]
    %v48 = vld [vmem:[%s1 + $0x70] sm:$0xff]
    %v49 = vld [vmem:[%s1 + $0x78] sm:$0xff]
    %v50 = vld [vmem:[%s2] sm:$0xff]
    %v51 = vld [vmem:[%s2 + $0x8] sm:$0xff]
    %52 = vmatprep.subr.mxu0 0.0
    %v53 = vand.u32 %v49, 4294901760
    %54 = vmatpush1.msra.mxu0 %v53
    %55 = vmatprep.subr.mxu0 0.0
    %v56 = vand.u32 %v48, 4294901760
    %57 = vmatpush1.msra.mxu0 %v56
    %58 = vmatprep.subr.mxu0 0.0
    %v59 = vand.u32 %v47, 4294901760
    %60 = vmatpush1.msra.mxu0 %v59
    %61 = vmatprep.subr.mxu0 0.0
    %v62 = vand.u32 %v46, 4294901760
    %63 = vmatpush1.msra.mxu0 %v62
    %64 = vmatprep.subr.mxu0 0.0
    %v65 = vand.u32 %v45, 4294901760
    %66 = vmatpush1.msra.mxu0 %v65
    %67 = vmatprep.subr.mxu0 0.0
    %v68 = vand.u32 %v44, 4294901760
    %69 = vmatpush1.msra.mxu0 %v68
    %70 = vmatprep.subr.mxu0 0.0
    %v71 = vand.u32 %v43, 4294901760
    %72 = vmatpush1.msra.mxu0 %v71
    %73 = vmatprep.subr.mxu0 0.0
    %v74 = vand.u32 %v42, 4294901760
    %75 = vmatpush1.msra.mxu0 %v74
    %76 = vmatprep.subr.mxu0 0.0
    %v77 = vand.u32 %v41, 4294901760
    %78 = vmatpush1.msra.mxu0 %v77
    %79 = vmatprep.subr.mxu0 0.0
    %v80 = vand.u32 %v40, 4294901760
    %81 = vmatpush1.msra.mxu0 %v80
    %82 = vmatprep.subr.mxu0 0.0
    %v83 = vand.u32 %v39, 4294901760
    %84 = vmatpush1.msra.mxu0 %v83
    %85 = vmatprep.subr.mxu0 0.0
    %v86 = vand.u32 %v38, 4294901760
    %87 = vmatpush1.msra.mxu0 %v86
    %88 = vmatprep.subr.mxu0 0.0
    %v89 = vand.u32 %v37, 4294901760
    %90 = vmatpush1.msra.mxu0 %v89
    %91 = vmatprep.subr.mxu0 0.0
    %v92 = vand.u32 %v36, 4294901760
    %93 = vmatpush1.msra.mxu0 %v92
    %94 = vmatprep.subr.mxu0 0.0
    %v95 = vand.u32 %v35, 4294901760
    %96 = vmatpush1.msra.mxu0 %v95
    %97 = vmatprep.subr.mxu0 0.0
    %v98 = vand.u32 %v34, 4294901760
    %99 = vmatpush1.msra.mxu0 %v98
    %100 = vmatprep.subr.mxu0 0.0
    %101 = vmatpush2.msra.mxu0 0.0
    %102 = vmatprep.subr.mxu0 0.0
    %103 = vmatpush2.msra.mxu0 0.0
    %104 = vmatprep.subr.mxu0 0.0
    %105 = vmatpush2.msra.mxu0 0.0
    %106 = vmatprep.subr.mxu0 0.0
    %107 = vmatpush2.msra.mxu0 0.0
    %108 = vmatprep.subr.mxu0 0.0
    %109 = vmatpush2.msra.mxu0 0.0
    %110 = vmatprep.subr.mxu0 0.0
    %111 = vmatpush2.msra.mxu0 0.0
    %112 = vmatprep.subr.mxu0 0.0
    %113 = vmatpush2.msra.mxu0 0.0
    %114 = vmatprep.subr.mxu0 0.0
    %115 = vmatpush2.msra.mxu0 0.0
    %116 = vmatprep.subr.mxu0 0.0
    %117 = vmatpush2.msra.mxu0 0.0
    %118 = vmatprep.subr.mxu0 0.0
    %119 = vmatpush2.msra.mxu0 0.0
    %120 = vmatprep.subr.mxu0 0.0
    %121 = vmatpush2.msra.mxu0 0.0
    %122 = vmatprep.subr.mxu0 0.0
    %123 = vmatpush2.msra.mxu0 0.0
    %124 = vmatprep.subr.mxu0 0.0
    %125 = vmatpush2.msra.mxu0 0.0
    %126 = vmatprep.subr.mxu0 0.0
    %127 = vmatpush2.msra.mxu0 0.0
    %128 = vmatprep.subr.mxu0 0.0
    %129 = vmatpush2.msra.mxu0 0.0
    %130 = vmatprep.subr.mxu0 0.0
    %131 = vmatpush2.msra.mxu0 0.0
    %132 = vmatprep.mubr.f32.mxu0 0.0
    %v133 = vand.u32 %v32, 4294901760
    %v134 = vsub.f32 %v32, %v133
    %v135 = vand.u32 %v134, 4294901760
    %v136 = vsub.f32 %v134, %v135
    %v137 = vand.u32 %v136, 4294901760
    %138 = vmatmul.mubr.f32.gmra.mxu0 %v137
    %v139 = vpop.f32.mrf.mxu0
    %v140 = vadd.f32 %v50, %v139
    %v141 = vpop.f32.mrf.mxu0
    %142 = vmatprep.mubr.f32.mxu0 0.0
    %v143 = vand.u32 %v33, 4294901760
    %v144 = vsub.f32 %v33, %v143
    %v145 = vand.u32 %v144, 4294901760
    %v146 = vsub.f32 %v144, %v145
    %v147 = vand.u32 %v146, 4294901760
    %148 = vmatmul.mubr.f32.gmra.mxu0 %v147
    %v149 = vpop.f32.mrf.mxu0
    %v150 = vadd.f32 %v51, %v149
    %v151 = vpop.f32.mrf.mxu0
    %152 = vdwg.mxu0
    %153 = vmatprep.subr.mxu0 0.0
    %v154 = vand.u32 %v49, 4294901760
    %v155 = vsub.f32 %v49, %v154
    %v156 = vand.u32 %v155, 4294901760
    %v157 = vsub.f32 %v155, %v156
    %v158 = vand.u32 %v157, 4294901760
    %159 = vmatpush1.msra.mxu0 %v158
    %160 = vmatprep.subr.mxu0 0.0
    %v161 = vand.u32 %v48, 4294901760
    %v162 = vsub.f32 %v48, %v161
    %v163 = vand.u32 %v162, 4294901760
    %v164 = vsub.f32 %v162, %v163
    %v165 = vand.u32 %v164, 4294901760
    %166 = vmatpush1.msra.mxu0 %v165
    %167 = vmatprep.subr.mxu0 0.0
    %v168 = vand.u32 %v47, 4294901760
    %v169 = vsub.f32 %v47, %v168
    %v170 = vand.u32 %v169, 4294901760
    %v171 = vsub.f32 %v169, %v170
    %v172 = vand.u32 %v171, 4294901760
    %173 = vmatpush1.msra.mxu0 %v172
    %174 = vmatprep.subr.mxu0 0.0
    %v175 = vand.u32 %v46, 4294901760
    %v176 = vsub.f32 %v46, %v175
    %v177 = vand.u32 %v176, 4294901760
    %v178 = vsub.f32 %v176, %v177
    %v179 = vand.u32 %v178, 4294901760
    %180 = vmatpush1.msra.mxu0 %v179
    %181 = vmatprep.subr.mxu0 0.0
    %v182 = vand.u32 %v45, 4294901760
    %v183 = vsub.f32 %v45, %v182
    %v184 = vand.u32 %v183, 4294901760
    %v185 = vsub.f32 %v183, %v184
    %v186 = vand.u32 %v185, 4294901760
    %187 = vmatpush1.msra.mxu0 %v186
    %188 = vmatprep.subr.mxu0 0.0
    %v189 = vand.u32 %v44, 4294901760
    %v190 = vsub.f32 %v44, %v189
    %v191 = vand.u32 %v190, 4294901760
    %v192 = vsub.f32 %v190, %v191
    %v193 = vand.u32 %v192, 4294901760
    %194 = vmatpush1.msra.mxu0 %v193
    %195 = vmatprep.subr.mxu0 0.0
    %v196 = vand.u32 %v43, 4294901760
    %v197 = vsub.f32 %v43, %v196
    %v198 = vand.u32 %v197, 4294901760
    %v199 = vsub.f32 %v197, %v198
    %v200 = vand.u32 %v199, 4294901760
    %201 = vmatpush1.msra.mxu0 %v200
    %202 = vmatprep.subr.mxu0 0.0
    %v203 = vand.u32 %v42, 4294901760
    %v204 = vsub.f32 %v42, %v203
    %v205 = vand.u32 %v204, 4294901760
    %v206 = vsub.f32 %v204, %v205
    %v207 = vand.u32 %v206, 4294901760
    %208 = vmatpush1.msra.mxu0 %v207
    %209 = vmatprep.subr.mxu0 0.0
    %v210 = vand.u32 %v41, 4294901760
    %v211 = vsub.f32 %v41, %v210
    %v212 = vand.u32 %v211, 4294901760
    %v213 = vsub.f32 %v211, %v212
    %v214 = vand.u32 %v213, 4294901760
    %215 = vmatpush1.msra.mxu0 %v214
    %216 = vmatprep.subr.mxu0 0.0
    %v217 = vand.u32 %v40, 4294901760
    %v218 = vsub.f32 %v40, %v217
    %v219 = vand.u32 %v218, 4294901760
    %v220 = vsub.f32 %v218, %v219
    %v221 = vand.u32 %v220, 4294901760
    %222 = vmatpush1.msra.mxu0 %v221
    %223 = vmatprep.subr.mxu0 0.0
    %v224 = vand.u32 %v39, 4294901760
    %v225 = vsub.f32 %v39, %v224
    %v226 = vand.u32 %v225, 4294901760
    %v227 = vsub.f32 %v225, %v226
    %v228 = vand.u32 %v227, 4294901760
    %229 = vmatpush1.msra.mxu0 %v228
    %230 = vmatprep.subr.mxu0 0.0
    %v231 = vand.u32 %v38, 4294901760
    %v232 = vsub.f32 %v38, %v231
    %v233 = vand.u32 %v232, 4294901760
    %v234 = vsub.f32 %v232, %v233
    %v235 = vand.u32 %v234, 4294901760
    %236 = vmatpush1.msra.mxu0 %v235
    %237 = vmatprep.subr.mxu0 0.0
    %v238 = vand.u32 %v37, 4294901760
    %v239 = vsub.f32 %v37, %v238
    %v240 = vand.u32 %v239, 4294901760
    %v241 = vsub.f32 %v239, %v240
    %v242 = vand.u32 %v241, 4294901760
    %243 = vmatpush1.msra.mxu0 %v242
    %244 = vmatprep.subr.mxu0 0.0
    %v245 = vand.u32 %v36, 4294901760
    %v246 = vsub.f32 %v36, %v245
    %v247 = vand.u32 %v246, 4294901760
    %v248 = vsub.f32 %v246, %v247
    %v249 = vand.u32 %v248, 4294901760
    %250 = vmatpush1.msra.mxu0 %v249
    %251 = vmatprep.subr.mxu0 0.0
    %v252 = vand.u32 %v35, 4294901760
    %v253 = vsub.f32 %v35, %v252
    %v254 = vand.u32 %v253, 4294901760
    %v255 = vsub.f32 %v253, %v254
    %v256 = vand.u32 %v255, 4294901760
    %257 = vmatpush1.msra.mxu0 %v256
    %258 = vmatprep.subr.mxu0 0.0
    %v259 = vand.u32 %v34, 4294901760
    %v260 = vsub.f32 %v34, %v259
    %v261 = vand.u32 %v260, 4294901760
    %v262 = vsub.f32 %v260, %v261
    %v263 = vand.u32 %v262, 4294901760
    %264 = vmatpush1.msra.mxu0 %v263
    %265 = vmatprep.subr.mxu0 0.0
    %266 = vmatpush2.msra.mxu0 0.0
    %267 = vmatprep.subr.mxu0 0.0
    %268 = vmatpush2.msra.mxu0 0.0
    %269 = vmatprep.subr.mxu0 0.0
    %270 = vmatpush2.msra.mxu0 0.0
    %271 = vmatprep.subr.mxu0 0.0
    %272 = vmatpush2.msra.mxu0 0.0
    %273 = vmatprep.subr.mxu0 0.0
    %274 = vmatpush2.msra.mxu0 0.0
    %275 = vmatprep.subr.mxu0 0.0
    %276 = vmatpush2.msra.mxu0 0.0
    %277 = vmatprep.subr.mxu0 0.0
    %278 = vmatpush2.msra.mxu0 0.0
    %279 = vmatprep.subr.mxu0 0.0
    %280 = vmatpush2.msra.mxu0 0.0
    %281 = vmatprep.subr.mxu0 0.0
    %282 = vmatpush2.msra.mxu0 0.0
    %283 = vmatprep.subr.mxu0 0.0
    %284 = vmatpush2.msra.mxu0 0.0
    %285 = vmatprep.subr.mxu0 0.0
    %286 = vmatpush2.msra.mxu0 0.0
    %287 = vmatprep.subr.mxu0 0.0
    %288 = vmatpush2.msra.mxu0 0.0
    %289 = vmatprep.subr.mxu0 0.0
    %290 = vmatpush2.msra.mxu0 0.0
    %291 = vmatprep.subr.mxu0 0.0
    %292 = vmatpush2.msra.mxu0 0.0
    %293 = vmatprep.subr.mxu0 0.0
    %294 = vmatpush2.msra.mxu0 0.0
    %295 = vmatprep.subr.mxu0 0.0
    %296 = vmatpush2.msra.mxu0 0.0
    %297 = vmatprep.mubr.f32.mxu0 0.0
    %v298 = vand.u32 %v32, 4294901760
    %299 = vmatmul.mubr.f32.gmra.mxu0 %v298
    %v300 = vpop.f32.mrf.mxu0
    %v301 = vadd.f32 %v140, %v300
    %v302 = vpop.f32.mrf.mxu0
    %303 = vmatprep.mubr.f32.mxu0 0.0
    %v304 = vand.u32 %v33, 4294901760
    %305 = vmatmul.mubr.f32.gmra.mxu0 %v304
    %v306 = vpop.f32.mrf.mxu0
    %v307 = vadd.f32 %v150, %v306
    %v308 = vpop.f32.mrf.mxu0
    %309 = vdwg.mxu0
    %310 = vmatprep.subr.mxu0 0.0
    %v311 = vand.u32 %v49, 4294901760
    %v312 = vsub.f32 %v49, %v311
    %313 = vmatpush1.msra.mxu0 %v312
    %314 = vmatprep.subr.mxu0 0.0
    %v315 = vand.u32 %v48, 4294901760
    %v316 = vsub.f32 %v48, %v315
    %317 = vmatpush1.msra.mxu0 %v316
    %318 = vmatprep.subr.mxu0 0.0
    %v319 = vand.u32 %v47, 4294901760
    %v320 = vsub.f32 %v47, %v319
    %321 = vmatpush1.msra.mxu0 %v320
    %322 = vmatprep.subr.mxu0 0.0
    %v323 = vand.u32 %v46, 4294901760
    %v324 = vsub.f32 %v46, %v323
    %325 = vmatpush1.msra.mxu0 %v324
    %326 = vmatprep.subr.mxu0 0.0
    %v327 = vand.u32 %v45, 4294901760
    %v328 = vsub.f32 %v45, %v327
    %329 = vmatpush1.msra.mxu0 %v328
    %330 = vmatprep.subr.mxu0 0.0
    %v331 = vand.u32 %v44, 4294901760
    %v332 = vsub.f32 %v44, %v331
    %333 = vmatpush1.msra.mxu0 %v332
    %334 = vmatprep.subr.mxu0 0.0
    %v335 = vand.u32 %v43, 4294901760
    %v336 = vsub.f32 %v43, %v335
    %337 = vmatpush1.msra.mxu0 %v336
    %338 = vmatprep.subr.mxu0 0.0
    %v339 = vand.u32 %v42, 4294901760
    %v340 = vsub.f32 %v42, %v339
    %341 = vmatpush1.msra.mxu0 %v340
    %342 = vmatprep.subr.mxu0 0.0
    %v343 = vand.u32 %v41, 4294901760
    %v344 = vsub.f32 %v41, %v343
    %345 = vmatpush1.msra.mxu0 %v344
    %346 = vmatprep.subr.mxu0 0.0
    %v347 = vand.u32 %v40, 4294901760
    %v348 = vsub.f32 %v40, %v347
    %349 = vmatpush1.msra.mxu0 %v348
    %350 = vmatprep.subr.mxu0 0.0
    %v351 = vand.u32 %v39, 4294901760
    %v352 = vsub.f32 %v39, %v351
    %353 = vmatpush1.msra.mxu0 %v352
    %354 = vmatprep.subr.mxu0 0.0
    %v355 = vand.u32 %v38, 4294901760
    %v356 = vsub.f32 %v38, %v355
    %357 = vmatpush1.msra.mxu0 %v356
    %358 = vmatprep.subr.mxu0 0.0
    %v359 = vand.u32 %v37, 4294901760
    %v360 = vsub.f32 %v37, %v359
    %361 = vmatpush1.msra.mxu0 %v360
    %362 = vmatprep.subr.mxu0 0.0
    %v363 = vand.u32 %v36, 4294901760
    %v364 = vsub.f32 %v36, %v363
    %365 = vmatpush1.msra.mxu0 %v364
    %366 = vmatprep.subr.mxu0 0.0
    %v367 = vand.u32 %v35, 4294901760
    %v368 = vsub.f32 %v35, %v367
    %369 = vmatpush1.msra.mxu0 %v368
    %370 = vmatprep.subr.mxu0 0.0
    %v371 = vand.u32 %v34, 4294901760
    %v372 = vsub.f32 %v34, %v371
    %373 = vmatpush1.msra.mxu0 %v372
    %374 = vmatprep.subr.mxu0 0.0
    %375 = vmatpush2.msra.mxu0 0.0
    %376 = vmatprep.subr.mxu0 0.0
    %377 = vmatpush2.msra.mxu0 0.0
    %378 = vmatprep.subr.mxu0 0.0
    %379 = vmatpush2.msra.mxu0 0.0
    %380 = vmatprep.subr.mxu0 0.0
    %381 = vmatpush2.msra.mxu0 0.0
    %382 = vmatprep.subr.mxu0 0.0
    %383 = vmatpush2.msra.mxu0 0.0
    %384 = vmatprep.subr.mxu0 0.0
    %385 = vmatpush2.msra.mxu0 0.0
    %386 = vmatprep.subr.mxu0 0.0
    %387 = vmatpush2.msra.mxu0 0.0
    %388 = vmatprep.subr.mxu0 0.0
    %389 = vmatpush2.msra.mxu0 0.0
    %390 = vmatprep.subr.mxu0 0.0
    %391 = vmatpush2.msra.mxu0 0.0
    %392 = vmatprep.subr.mxu0 0.0
    %393 = vmatpush2.msra.mxu0 0.0
    %394 = vmatprep.subr.mxu0 0.0
    %395 = vmatpush2.msra.mxu0 0.0
    %396 = vmatprep.subr.mxu0 0.0
    %397 = vmatpush2.msra.mxu0 0.0
    %398 = vmatprep.subr.mxu0 0.0
    %399 = vmatpush2.msra.mxu0 0.0
    %400 = vmatprep.subr.mxu0 0.0
    %401 = vmatpush2.msra.mxu0 0.0
    %402 = vmatprep.subr.mxu0 0.0
    %403 = vmatpush2.msra.mxu0 0.0
    %404 = vmatprep.subr.mxu0 0.0
    %405 = vmatpush2.msra.mxu0 0.0
    %406 = vmatprep.mubr.f32.mxu0 0.0
    %v407 = vand.u32 %v32, 4294901760
    %v408 = vsub.f32 %v32, %v407
    %409 = vmatmul.mubr.f32.gmra.mxu0 %v408
    %v410 = vpop.f32.mrf.mxu0
    %v411 = vadd.f32 %v301, %v410
    %v412 = vpop.f32.mrf.mxu0
    %413 = vmatprep.mubr.f32.mxu0 0.0
    %v414 = vand.u32 %v33, 4294901760
    %v415 = vsub.f32 %v33, %v414
    %416 = vmatmul.mubr.f32.gmra.mxu0 %v415
    %v417 = vpop.f32.mrf.mxu0
    %v418 = vadd.f32 %v307, %v417
    %v419 = vpop.f32.mrf.mxu0
    %420 = vdwg.mxu0
    %421 = vmatprep.subr.mxu0 0.0
    %v422 = vand.u32 %v49, 4294901760
    %423 = vmatpush1.msra.mxu0 %v422
    %424 = vmatprep.subr.mxu0 0.0
    %v425 = vand.u32 %v48, 4294901760
    %426 = vmatpush1.msra.mxu0 %v425
    %427 = vmatprep.subr.mxu0 0.0
    %v428 = vand.u32 %v47, 4294901760
    %429 = vmatpush1.msra.mxu0 %v428
    %430 = vmatprep.subr.mxu0 0.0
    %v431 = vand.u32 %v46, 4294901760
    %432 = vmatpush1.msra.mxu0 %v431
    %433 = vmatprep.subr.mxu0 0.0
    %v434 = vand.u32 %v45, 4294901760
    %435 = vmatpush1.msra.mxu0 %v434
    %436 = vmatprep.subr.mxu0 0.0
    %v437 = vand.u32 %v44, 4294901760
    %438 = vmatpush1.msra.mxu0 %v437
    %439 = vmatprep.subr.mxu0 0.0
    %v440 = vand.u32 %v43, 4294901760
    %441 = vmatpush1.msra.mxu0 %v440
    %442 = vmatprep.subr.mxu0 0.0
    %v443 = vand.u32 %v42, 4294901760
    %444 = vmatpush1.msra.mxu0 %v443
    %445 = vmatprep.subr.mxu0 0.0
    %v446 = vand.u32 %v41, 4294901760
    %447 = vmatpush1.msra.mxu0 %v446
    %448 = vmatprep.subr.mxu0 0.0
    %v449 = vand.u32 %v40, 4294901760
    %450 = vmatpush1.msra.mxu0 %v449
    %451 = vmatprep.subr.mxu0 0.0
    %v452 = vand.u32 %v39, 4294901760
    %453 = vmatpush1.msra.mxu0 %v452
    %454 = vmatprep.subr.mxu0 0.0
    %v455 = vand.u32 %v38, 4294901760
    %456 = vmatpush1.msra.mxu0 %v455
    %457 = vmatprep.subr.mxu0 0.0
    %v458 = vand.u32 %v37, 4294901760
    %459 = vmatpush1.msra.mxu0 %v458
    %460 = vmatprep.subr.mxu0 0.0
    %v461 = vand.u32 %v36, 4294901760
    %462 = vmatpush1.msra.mxu0 %v461
    %463 = vmatprep.subr.mxu0 0.0
    %v464 = vand.u32 %v35, 4294901760
    %465 = vmatpush1.msra.mxu0 %v464
    %466 = vmatprep.subr.mxu0 0.0
    %v467 = vand.u32 %v34, 4294901760
    %468 = vmatpush1.msra.mxu0 %v467
    %469 = vmatprep.subr.mxu0 0.0
    %470 = vmatpush2.msra.mxu0 0.0
    %471 = vmatprep.subr.mxu0 0.0
    %472 = vmatpush2.msra.mxu0 0.0
    %473 = vmatprep.subr.mxu0 0.0
    %474 = vmatpush2.msra.mxu0 0.0
    %475 = vmatprep.subr.mxu0 0.0
    %476 = vmatpush2.msra.mxu0 0.0
    %477 = vmatprep.subr.mxu0 0.0
    %478 = vmatpush2.msra.mxu0 0.0
    %479 = vmatprep.subr.mxu0 0.0
    %480 = vmatpush2.msra.mxu0 0.0
    %481 = vmatprep.subr.mxu0 0.0
    %482 = vmatpush2.msra.mxu0 0.0
    %483 = vmatprep.subr.mxu0 0.0
    %484 = vmatpush2.msra.mxu0 0.0
    %485 = vmatprep.subr.mxu0 0.0
    %486 = vmatpush2.msra.mxu0 0.0
    %487 = vmatprep.subr.mxu0 0.0
    %488 = vmatpush2.msra.mxu0 0.0
    %489 = vmatprep.subr.mxu0 0.0
    %490 = vmatpush2.msra.mxu0 0.0
    %491 = vmatprep.subr.mxu0 0.0
    %492 = vmatpush2.msra.mxu0 0.0
    %493 = vmatprep.subr.mxu0 0.0
    %494 = vmatpush2.msra.mxu0 0.0
    %495 = vmatprep.subr.mxu0 0.0
    %496 = vmatpush2.msra.mxu0 0.0
    %497 = vmatprep.subr.mxu0 0.0
    %498 = vmatpush2.msra.mxu0 0.0
    %499 = vmatprep.subr.mxu0 0.0
    %500 = vmatpush2.msra.mxu0 0.0
    %501 = vmatprep.mubr.f32.mxu0 0.0
    %v502 = vand.u32 %v32, 4294901760
    %v503 = vsub.f32 %v32, %v502
    %v504 = vand.u32 %v503, 4294901760
    %505 = vmatmul.mubr.f32.gmra.mxu0 %v504
    %v506 = vpop.f32.mrf.mxu0
    %v507 = vadd.f32 %v411, %v506
    %v508 = vpop.f32.mrf.mxu0
    %509 = vmatprep.mubr.f32.mxu0 0.0
    %v510 = vand.u32 %v33, 4294901760
    %v511 = vsub.f32 %v33, %v510
    %v512 = vand.u32 %v511, 4294901760
    %513 = vmatmul.mubr.f32.gmra.mxu0 %v512
    %v514 = vpop.f32.mrf.mxu0
    %v515 = vadd.f32 %v418, %v514
    %v516 = vpop.f32.mrf.mxu0
    %517 = vdwg.mxu0
    %518 = vmatprep.subr.mxu0 0.0
    %v519 = vand.u32 %v49, 4294901760
    %v520 = vsub.f32 %v49, %v519
    %v521 = vand.u32 %v520, 4294901760
    %522 = vmatpush1.msra.mxu0 %v521
    %523 = vmatprep.subr.mxu0 0.0
    %v524 = vand.u32 %v48, 4294901760
    %v525 = vsub.f32 %v48, %v524
    %v526 = vand.u32 %v525, 4294901760
    %527 = vmatpush1.msra.mxu0 %v526
    %528 = vmatprep.subr.mxu0 0.0
    %v529 = vand.u32 %v47, 4294901760
    %v530 = vsub.f32 %v47, %v529
    %v531 = vand.u32 %v530, 4294901760
    %532 = vmatpush1.msra.mxu0 %v531
    %533 = vmatprep.subr.mxu0 0.0
    %v534 = vand.u32 %v46, 4294901760
    %v535 = vsub.f32 %v46, %v534
    %v536 = vand.u32 %v535, 4294901760
    %537 = vmatpush1.msra.mxu0 %v536
    %538 = vmatprep.subr.mxu0 0.0
    %v539 = vand.u32 %v45, 4294901760
    %v540 = vsub.f32 %v45, %v539
    %v541 = vand.u32 %v540, 4294901760
    %542 = vmatpush1.msra.mxu0 %v541
    %543 = vmatprep.subr.mxu0 0.0
    %v544 = vand.u32 %v44, 4294901760
    %v545 = vsub.f32 %v44, %v544
    %v546 = vand.u32 %v545, 4294901760
    %547 = vmatpush1.msra.mxu0 %v546
    %548 = vmatprep.subr.mxu0 0.0
    %v549 = vand.u32 %v43, 4294901760
    %v550 = vsub.f32 %v43, %v549
    %v551 = vand.u32 %v550, 4294901760
    %552 = vmatpush1.msra.mxu0 %v551
    %553 = vmatprep.subr.mxu0 0.0
    %v554 = vand.u32 %v42, 4294901760
    %v555 = vsub.f32 %v42, %v554
    %v556 = vand.u32 %v555, 4294901760
    %557 = vmatpush1.msra.mxu0 %v556
    %558 = vmatprep.subr.mxu0 0.0
    %v559 = vand.u32 %v41, 4294901760
    %v560 = vsub.f32 %v41, %v559
    %v561 = vand.u32 %v560, 4294901760
    %562 = vmatpush1.msra.mxu0 %v561
    %563 = vmatprep.subr.mxu0 0.0
    %v564 = vand.u32 %v40, 4294901760
    %v565 = vsub.f32 %v40, %v564
    %v566 = vand.u32 %v565, 4294901760
    %567 = vmatpush1.msra.mxu0 %v566
    %568 = vmatprep.subr.mxu0 0.0
    %v569 = vand.u32 %v39, 4294901760
    %v570 = vsub.f32 %v39, %v569
    %v571 = vand.u32 %v570, 4294901760
    %572 = vmatpush1.msra.mxu0 %v571
    %573 = vmatprep.subr.mxu0 0.0
    %v574 = vand.u32 %v38, 4294901760
    %v575 = vsub.f32 %v38, %v574
    %v576 = vand.u32 %v575, 4294901760
    %577 = vmatpush1.msra.mxu0 %v576
    %578 = vmatprep.subr.mxu0 0.0
    %v579 = vand.u32 %v37, 4294901760
    %v580 = vsub.f32 %v37, %v579
    %v581 = vand.u32 %v580, 4294901760
    %582 = vmatpush1.msra.mxu0 %v581
    %583 = vmatprep.subr.mxu0 0.0
    %v584 = vand.u32 %v36, 4294901760
    %v585 = vsub.f32 %v36, %v584
    %v586 = vand.u32 %v585, 4294901760
    %587 = vmatpush1.msra.mxu0 %v586
    %588 = vmatprep.subr.mxu0 0.0
    %v589 = vand.u32 %v35, 4294901760
    %v590 = vsub.f32 %v35, %v589
    %v591 = vand.u32 %v590, 4294901760
    %592 = vmatpush1.msra.mxu0 %v591
    %593 = vmatprep.subr.mxu0 0.0
    %v594 = vand.u32 %v34, 4294901760
    %v595 = vsub.f32 %v34, %v594
    %v596 = vand.u32 %v595, 4294901760
    %597 = vmatpush1.msra.mxu0 %v596
    %598 = vmatprep.subr.mxu0 0.0
    %599 = vmatpush2.msra.mxu0 0.0
    %600 = vmatprep.subr.mxu0 0.0
    %601 = vmatpush2.msra.mxu0 0.0
    %602 = vmatprep.subr.mxu0 0.0
    %603 = vmatpush2.msra.mxu0 0.0
    %604 = vmatprep.subr.mxu0 0.0
    %605 = vmatpush2.msra.mxu0 0.0
    %606 = vmatprep.subr.mxu0 0.0
    %607 = vmatpush2.msra.mxu0 0.0
    %608 = vmatprep.subr.mxu0 0.0
    %609 = vmatpush2.msra.mxu0 0.0
    %610 = vmatprep.subr.mxu0 0.0
    %611 = vmatpush2.msra.mxu0 0.0
    %612 = vmatprep.subr.mxu0 0.0
    %613 = vmatpush2.msra.mxu0 0.0
    %614 = vmatprep.subr.mxu0 0.0
    %615 = vmatpush2.msra.mxu0 0.0
    %616 = vmatprep.subr.mxu0 0.0
    %617 = vmatpush2.msra.mxu0 0.0
    %618 = vmatprep.subr.mxu0 0.0
    %619 = vmatpush2.msra.mxu0 0.0
    %620 = vmatprep.subr.mxu0 0.0
    %621 = vmatpush2.msra.mxu0 0.0
    %622 = vmatprep.subr.mxu0 0.0
    %623 = vmatpush2.msra.mxu0 0.0
    %624 = vmatprep.subr.mxu0 0.0
    %625 = vmatpush2.msra.mxu0 0.0
    %626 = vmatprep.subr.mxu0 0.0
    %627 = vmatpush2.msra.mxu0 0.0
    %628 = vmatprep.subr.mxu0 0.0
    %629 = vmatpush2.msra.mxu0 0.0
    %630 = vmatprep.mubr.f32.mxu0 0.0
    %v631 = vand.u32 %v32, 4294901760
    %632 = vmatmul.mubr.f32.gmra.mxu0 %v631
    %v633 = vpop.f32.mrf.mxu0
    %v634 = vadd.f32 %v507, %v633
    %v635 = vpop.f32.mrf.mxu0
    %636 = vmatprep.mubr.f32.mxu0 0.0
    %v637 = vand.u32 %v33, 4294901760
    %638 = vmatmul.mubr.f32.gmra.mxu0 %v637
    %v639 = vpop.f32.mrf.mxu0
    %v640 = vadd.f32 %v515, %v639
    %v641 = vpop.f32.mrf.mxu0
    %642 = vdwg.mxu0
    %643 = vmatprep.subr.mxu0 0.0
    %v644 = vand.u32 %v49, 4294901760
    %645 = vmatpush1.msra.mxu0 %v644
    %646 = vmatprep.subr.mxu0 0.0
    %v647 = vand.u32 %v48, 4294901760
    %648 = vmatpush1.msra.mxu0 %v647
    %649 = vmatprep.subr.mxu0 0.0
    %v650 = vand.u32 %v47, 4294901760
    %651 = vmatpush1.msra.mxu0 %v650
    %652 = vmatprep.subr.mxu0 0.0
    %v653 = vand.u32 %v46, 4294901760
    %654 = vmatpush1.msra.mxu0 %v653
    %655 = vmatprep.subr.mxu0 0.0
    %v656 = vand.u32 %v45, 4294901760
    %657 = vmatpush1.msra.mxu0 %v656
    %658 = vmatprep.subr.mxu0 0.0
    %v659 = vand.u32 %v44, 4294901760
    %660 = vmatpush1.msra.mxu0 %v659
    %661 = vmatprep.subr.mxu0 0.0
    %v662 = vand.u32 %v43, 4294901760
    %663 = vmatpush1.msra.mxu0 %v662
    %664 = vmatprep.subr.mxu0 0.0
    %v665 = vand.u32 %v42, 4294901760
    %666 = vmatpush1.msra.mxu0 %v665
    %667 = vmatprep.subr.mxu0 0.0
    %v668 = vand.u32 %v41, 4294901760
    %669 = vmatpush1.msra.mxu0 %v668
    %670 = vmatprep.subr.mxu0 0.0
    %v671 = vand.u32 %v40, 4294901760
    %672 = vmatpush1.msra.mxu0 %v671
    %673 = vmatprep.subr.mxu0 0.0
    %v674 = vand.u32 %v39, 4294901760
    %675 = vmatpush1.msra.mxu0 %v674
    %676 = vmatprep.subr.mxu0 0.0
    %v677 = vand.u32 %v38, 4294901760
    %678 = vmatpush1.msra.mxu0 %v677
    %679 = vmatprep.subr.mxu0 0.0
    %v680 = vand.u32 %v37, 4294901760
    %681 = vmatpush1.msra.mxu0 %v680
    %682 = vmatprep.subr.mxu0 0.0
    %v683 = vand.u32 %v36, 4294901760
    %684 = vmatpush1.msra.mxu0 %v683
    %685 = vmatprep.subr.mxu0 0.0
    %v686 = vand.u32 %v35, 4294901760
    %687 = vmatpush1.msra.mxu0 %v686
    %688 = vmatprep.subr.mxu0 0.0
    %v689 = vand.u32 %v34, 4294901760
    %690 = vmatpush1.msra.mxu0 %v689
    %691 = vmatprep.subr.mxu0 0.0
    %692 = vmatpush2.msra.mxu0 0.0
    %693 = vmatprep.subr.mxu0 0.0
    %694 = vmatpush2.msra.mxu0 0.0
    %695 = vmatprep.subr.mxu0 0.0
    %696 = vmatpush2.msra.mxu0 0.0
    %697 = vmatprep.subr.mxu0 0.0
    %698 = vmatpush2.msra.mxu0 0.0
    %699 = vmatprep.subr.mxu0 0.0
    %700 = vmatpush2.msra.mxu0 0.0
    %701 = vmatprep.subr.mxu0 0.0
    %702 = vmatpush2.msra.mxu0 0.0
    %703 = vmatprep.subr.mxu0 0.0
    %704 = vmatpush2.msra.mxu0 0.0
    %705 = vmatprep.subr.mxu0 0.0
    %706 = vmatpush2.msra.mxu0 0.0
    %707 = vmatprep.subr.mxu0 0.0
    %708 = vmatpush2.msra.mxu0 0.0
    %709 = vmatprep.subr.mxu0 0.0
    %710 = vmatpush2.msra.mxu0 0.0
    %711 = vmatprep.subr.mxu0 0.0
    %712 = vmatpush2.msra.mxu0 0.0
    %713 = vmatprep.subr.mxu0 0.0
    %714 = vmatpush2.msra.mxu0 0.0
    %715 = vmatprep.subr.mxu0 0.0
    %716 = vmatpush2.msra.mxu0 0.0
    %717 = vmatprep.subr.mxu0 0.0
    %718 = vmatpush2.msra.mxu0 0.0
    %719 = vmatprep.subr.mxu0 0.0
    %720 = vmatpush2.msra.mxu0 0.0
    %721 = vmatprep.subr.mxu0 0.0
    %722 = vmatpush2.msra.mxu0 0.0
    %723 = vmatprep.mubr.f32.mxu0 0.0
    %v724 = vand.u32 %v32, 4294901760
    %725 = vmatmul.mubr.f32.gmra.mxu0 %v724
    %v726 = vpop.f32.mrf.mxu0
    %v727 = vadd.f32 %v634, %v726
    %v728 = vpop.f32.mrf.mxu0
    %729 = vmatprep.mubr.f32.mxu0 0.0
    %v730 = vand.u32 %v33, 4294901760
    %731 = vmatmul.mubr.f32.gmra.mxu0 %v730
    %v732 = vpop.f32.mrf.mxu0
    %v733 = vadd.f32 %v640, %v732
    %v734 = vpop.f32.mrf.mxu0
    %735 = vdwg.mxu0
    %v736 = vld [vmem:[%s3] sm:$0xff]
    %v737 = vld [vmem:[%s3 + $0x8] sm:$0xff]
    %v738 = vld [vmem:[%s3 + $0x10] sm:$0xff]
    %v739 = vld [vmem:[%s3 + $0x18] sm:$0xff]
    %vm740 = vcmask 261120
    %v742 = vsel %vm740, %v727, 0
    %v745 = vsel %vm740, %v733, 0
    %747 = vmatprep.subr.mxu0 0.0
    %748 = vmatpush1.msra.mxu0 0.0
    %749 = vmatprep.subr.mxu0 0.0
    %750 = vmatpush1.msra.mxu0 0.0
    %751 = vmatprep.subr.mxu0 0.0
    %752 = vmatpush1.msra.mxu0 0.0
    %753 = vmatprep.subr.mxu0 0.0
    %754 = vmatpush1.msra.mxu0 0.0
    %755 = vmatprep.subr.mxu0 0.0
    %756 = vmatpush1.msra.mxu0 0.0
    %757 = vmatprep.subr.mxu0 0.0
    %758 = vmatpush1.msra.mxu0 0.0
    %759 = vmatprep.subr.mxu0 0.0
    %760 = vmatpush1.msra.mxu0 0.0
    %761 = vmatprep.subr.mxu0 0.0
    %762 = vmatpush1.msra.mxu0 0.0
    %763 = vmatprep.subr.mxu0 0.0
    %764 = vmatpush1.msra.mxu0 0.0
    %765 = vmatprep.subr.mxu0 0.0
    %766 = vmatpush1.msra.mxu0 0.0
    %767 = vmatprep.subr.mxu0 0.0
    %768 = vmatpush1.msra.mxu0 0.0
    %769 = vmatprep.subr.mxu0 0.0
    %770 = vmatpush1.msra.mxu0 0.0
    %771 = vmatprep.subr.mxu0 0.0
    %v772 = vand.u32 %v739, 4294901760
    %773 = vmatpush1.msra.mxu0 %v772
    %774 = vmatprep.subr.mxu0 0.0
    %v775 = vand.u32 %v738, 4294901760
    %776 = vmatpush1.msra.mxu0 %v775
    %777 = vmatprep.subr.mxu0 0.0
    %v778 = vand.u32 %v737, 4294901760
    %779 = vmatpush1.msra.mxu0 %v778
    %780 = vmatprep.subr.mxu0 0.0
    %v781 = vand.u32 %v736, 4294901760
    %782 = vmatpush1.msra.mxu0 %v781
    %783 = vmatprep.subr.mxu0 0.0
    %784 = vmatpush2.msra.mxu0 0.0
    %785 = vmatprep.subr.mxu0 0.0
    %786 = vmatpush2.msra.mxu0 0.0
    %787 = vmatprep.subr.mxu0 0.0
    %788 = vmatpush2.msra.mxu0 0.0
    %789 = vmatprep.subr.mxu0 0.0
    %790 = vmatpush2.msra.mxu0 0.0
    %791 = vmatprep.subr.mxu0 0.0
    %792 = vmatpush2.msra.mxu0 0.0
    %793 = vmatprep.subr.mxu0 0.0
    %794 = vmatpush2.msra.mxu0 0.0
    %795 = vmatprep.subr.mxu0 0.0
    %796 = vmatpush2.msra.mxu0 0.0
    %797 = vmatprep.subr.mxu0 0.0
    %798 = vmatpush2.msra.mxu0 0.0
    %799 = vmatprep.subr.mxu0 0.0
    %800 = vmatpush2.msra.mxu0 0.0
    %801 = vmatprep.subr.mxu0 0.0
    %802 = vmatpush2.msra.mxu0 0.0
    %803 = vmatprep.subr.mxu0 0.0
    %804 = vmatpush2.msra.mxu0 0.0
    %805 = vmatprep.subr.mxu0 0.0
    %806 = vmatpush2.msra.mxu0 0.0
    %807 = vmatprep.subr.mxu0 0.0
    %808 = vmatpush2.msra.mxu0 0.0
    %809 = vmatprep.subr.mxu0 0.0
    %810 = vmatpush2.msra.mxu0 0.0
    %811 = vmatprep.subr.mxu0 0.0
    %812 = vmatpush2.msra.mxu0 0.0
    %813 = vmatprep.subr.mxu0 0.0
    %814 = vmatpush2.msra.mxu0 0.0
    %815 = vmatprep.mubr.f32.mxu0 0.0
    %v816 = vand.u32 %v742, 4294901760
    %v817 = vsub.f32 %v742, %v816
    %v818 = vand.u32 %v817, 4294901760
    %v819 = vsub.f32 %v817, %v818
    %v820 = vand.u32 %v819, 4294901760
    %821 = vmatmul.mubr.f32.gmra.mxu0 %v820
    %v822 = vpop.f32.mrf.mxu0
    %v823 = vadd.f32 0.0, %v822
    %v824 = vpop.f32.mrf.mxu0
    %825 = vmatprep.mubr.f32.mxu0 0.0
    %v826 = vand.u32 %v745, 4294901760
    %v827 = vsub.f32 %v745, %v826
    %v828 = vand.u32 %v827, 4294901760
    %v829 = vsub.f32 %v827, %v828
    %v830 = vand.u32 %v829, 4294901760
    %831 = vmatmul.mubr.f32.gmra.mxu0 %v830
    %v832 = vpop.f32.mrf.mxu0
    %v833 = vadd.f32 0.0, %v832
    %v834 = vpop.f32.mrf.mxu0
    %835 = vdwg.mxu0
    %836 = vmatprep.subr.mxu0 0.0
    %837 = vmatpush1.msra.mxu0 0.0
    %838 = vmatprep.subr.mxu0 0.0
    %839 = vmatpush1.msra.mxu0 0.0
    %840 = vmatprep.subr.mxu0 0.0
    %841 = vmatpush1.msra.mxu0 0.0
    %842 = vmatprep.subr.mxu0 0.0
    %843 = vmatpush1.msra.mxu0 0.0
    %844 = vmatprep.subr.mxu0 0.0
    %845 = vmatpush1.msra.mxu0 0.0
    %846 = vmatprep.subr.mxu0 0.0
    %847 = vmatpush1.msra.mxu0 0.0
    %848 = vmatprep.subr.mxu0 0.0
    %849 = vmatpush1.msra.mxu0 0.0
    %850 = vmatprep.subr.mxu0 0.0
    %851 = vmatpush1.msra.mxu0 0.0
    %852 = vmatprep.subr.mxu0 0.0
    %853 = vmatpush1.msra.mxu0 0.0
    %854 = vmatprep.subr.mxu0 0.0
    %855 = vmatpush1.msra.mxu0 0.0
    %856 = vmatprep.subr.mxu0 0.0
    %857 = vmatpush1.msra.mxu0 0.0
    %858 = vmatprep.subr.mxu0 0.0
    %859 = vmatpush1.msra.mxu0 0.0
    %860 = vmatprep.subr.mxu0 0.0
    %v861 = vand.u32 %v739, 4294901760
    %v862 = vsub.f32 %v739, %v861
    %v863 = vand.u32 %v862, 4294901760
    %v864 = vsub.f32 %v862, %v863
    %v865 = vand.u32 %v864, 4294901760
    %866 = vmatpush1.msra.mxu0 %v865
    %867 = vmatprep.subr.mxu0 0.0
    %v868 = vand.u32 %v738, 4294901760
    %v869 = vsub.f32 %v738, %v868
    %v870 = vand.u32 %v869, 4294901760
    %v871 = vsub.f32 %v869, %v870
    %v872 = vand.u32 %v871, 4294901760
    %873 = vmatpush1.msra.mxu0 %v872
    %874 = vmatprep.subr.mxu0 0.0
    %v875 = vand.u32 %v737, 4294901760
    %v876 = vsub.f32 %v737, %v875
    %v877 = vand.u32 %v876, 4294901760
    %v878 = vsub.f32 %v876, %v877
    %v879 = vand.u32 %v878, 4294901760
    %880 = vmatpush1.msra.mxu0 %v879
    %881 = vmatprep.subr.mxu0 0.0
    %v882 = vand.u32 %v736, 4294901760
    %v883 = vsub.f32 %v736, %v882
    %v884 = vand.u32 %v883, 4294901760
    %v885 = vsub.f32 %v883, %v884
    %v886 = vand.u32 %v885, 4294901760
    %887 = vmatpush1.msra.mxu0 %v886
    %888 = vmatprep.subr.mxu0 0.0
    %889 = vmatpush2.msra.mxu0 0.0
    %890 = vmatprep.subr.mxu0 0.0
    %891 = vmatpush2.msra.mxu0 0.0
    %892 = vmatprep.subr.mxu0 0.0
    %893 = vmatpush2.msra.mxu0 0.0
    %894 = vmatprep.subr.mxu0 0.0
    %895 = vmatpush2.msra.mxu0 0.0
    %896 = vmatprep.subr.mxu0 0.0
    %897 = vmatpush2.msra.mxu0 0.0
    %898 = vmatprep.subr.mxu0 0.0
    %899 = vmatpush2.msra.mxu0 0.0
    %900 = vmatprep.subr.mxu0 0.0
    %901 = vmatpush2.msra.mxu0 0.0
    %902 = vmatprep.subr.mxu0 0.0
    %903 = vmatpush2.msra.mxu0 0.0
    %904 = vmatprep.subr.mxu0 0.0
    %905 = vmatpush2.msra.mxu0 0.0
    %906 = vmatprep.subr.mxu0 0.0
    %907 = vmatpush2.msra.mxu0 0.0
    %908 = vmatprep.subr.mxu0 0.0
    %909 = vmatpush2.msra.mxu0 0.0
    %910 = vmatprep.subr.mxu0 0.0
    %911 = vmatpush2.msra.mxu0 0.0
    %912 = vmatprep.subr.mxu0 0.0
    %913 = vmatpush2.msra.mxu0 0.0
    %914 = vmatprep.subr.mxu0 0.0
    %915 = vmatpush2.msra.mxu0 0.0
    %916 = vmatprep.subr.mxu0 0.0
    %917 = vmatpush2.msra.mxu0 0.0
    %918 = vmatprep.subr.mxu0 0.0
    %919 = vmatpush2.msra.mxu0 0.0
    %920 = vmatprep.mubr.f32.mxu0 0.0
    %v921 = vand.u32 %v742, 4294901760
    %922 = vmatmul.mubr.f32.gmra.mxu0 %v921
    %v923 = vpop.f32.mrf.mxu0
    %v924 = vadd.f32 %v823, %v923
    %v925 = vpop.f32.mrf.mxu0
    %926 = vmatprep.mubr.f32.mxu0 0.0
    %v927 = vand.u32 %v745, 4294901760
    %928 = vmatmul.mubr.f32.gmra.mxu0 %v927
    %v929 = vpop.f32.mrf.mxu0
    %v930 = vadd.f32 %v833, %v929
    %v931 = vpop.f32.mrf.mxu0
    %932 = vdwg.mxu0
    %933 = vmatprep.subr.mxu0 0.0
    %934 = vmatpush1.msra.mxu0 0.0
    %935 = vmatprep.subr.mxu0 0.0
    %936 = vmatpush1.msra.mxu0 0.0
    %937 = vmatprep.subr.mxu0 0.0
    %938 = vmatpush1.msra.mxu0 0.0
    %939 = vmatprep.subr.mxu0 0.0
    %940 = vmatpush1.msra.mxu0 0.0
    %941 = vmatprep.subr.mxu0 0.0
    %942 = vmatpush1.msra.mxu0 0.0
    %943 = vmatprep.subr.mxu0 0.0
    %944 = vmatpush1.msra.mxu0 0.0
    %945 = vmatprep.subr.mxu0 0.0
    %946 = vmatpush1.msra.mxu0 0.0
    %947 = vmatprep.subr.mxu0 0.0
    %948 = vmatpush1.msra.mxu0 0.0
    %949 = vmatprep.subr.mxu0 0.0
    %950 = vmatpush1.msra.mxu0 0.0
    %951 = vmatprep.subr.mxu0 0.0
    %952 = vmatpush1.msra.mxu0 0.0
    %953 = vmatprep.subr.mxu0 0.0
    %954 = vmatpush1.msra.mxu0 0.0
    %955 = vmatprep.subr.mxu0 0.0
    %956 = vmatpush1.msra.mxu0 0.0
    %957 = vmatprep.subr.mxu0 0.0
    %v958 = vand.u32 %v739, 4294901760
    %v959 = vsub.f32 %v739, %v958
    %960 = vmatpush1.msra.mxu0 %v959
    %961 = vmatprep.subr.mxu0 0.0
    %v962 = vand.u32 %v738, 4294901760
    %v963 = vsub.f32 %v738, %v962
    %964 = vmatpush1.msra.mxu0 %v963
    %965 = vmatprep.subr.mxu0 0.0
    %v966 = vand.u32 %v737, 4294901760
    %v967 = vsub.f32 %v737, %v966
    %968 = vmatpush1.msra.mxu0 %v967
    %969 = vmatprep.subr.mxu0 0.0
    %v970 = vand.u32 %v736, 4294901760
    %v971 = vsub.f32 %v736, %v970
    %972 = vmatpush1.msra.mxu0 %v971
    %973 = vmatprep.subr.mxu0 0.0
    %974 = vmatpush2.msra.mxu0 0.0
    %975 = vmatprep.subr.mxu0 0.0
    %976 = vmatpush2.msra.mxu0 0.0
    %977 = vmatprep.subr.mxu0 0.0
    %978 = vmatpush2.msra.mxu0 0.0
    %979 = vmatprep.subr.mxu0 0.0
    %980 = vmatpush2.msra.mxu0 0.0
    %981 = vmatprep.subr.mxu0 0.0
    %982 = vmatpush2.msra.mxu0 0.0
    %983 = vmatprep.subr.mxu0 0.0
    %984 = vmatpush2.msra.mxu0 0.0
    %985 = vmatprep.subr.mxu0 0.0
    %986 = vmatpush2.msra.mxu0 0.0
    %987 = vmatprep.subr.mxu0 0.0
    %988 = vmatpush2.msra.mxu0 0.0
    %989 = vmatprep.subr.mxu0 0.0
    %990 = vmatpush2.msra.mxu0 0.0
    %991 = vmatprep.subr.mxu0 0.0
    %992 = vmatpush2.msra.mxu0 0.0
    %993 = vmatprep.subr.mxu0 0.0
    %994 = vmatpush2.msra.mxu0 0.0
    %995 = vmatprep.subr.mxu0 0.0
    %996 = vmatpush2.msra.mxu0 0.0
    %997 = vmatprep.subr.mxu0 0.0
    %998 = vmatpush2.msra.mxu0 0.0
    %999 = vmatprep.subr.mxu0 0.0
    %1000 = vmatpush2.msra.mxu0 0.0
    %1001 = vmatprep.subr.mxu0 0.0
    %1002 = vmatpush2.msra.mxu0 0.0
    %1003 = vmatprep.subr.mxu0 0.0
    %1004 = vmatpush2.msra.mxu0 0.0
    %1005 = vmatprep.mubr.f32.mxu0 0.0
    %v1006 = vand.u32 %v742, 4294901760
    %v1007 = vsub.f32 %v742, %v1006
    %1008 = vmatmul.mubr.f32.gmra.mxu0 %v1007
    %v1009 = vpop.f32.mrf.mxu0
    %v1010 = vadd.f32 %v924, %v1009
    %v1011 = vpop.f32.mrf.mxu0
    %1012 = vmatprep.mubr.f32.mxu0 0.0
    %v1013 = vand.u32 %v745, 4294901760
    %v1014 = vsub.f32 %v745, %v1013
    %1015 = vmatmul.mubr.f32.gmra.mxu0 %v1014
    %v1016 = vpop.f32.mrf.mxu0
    %v1017 = vadd.f32 %v930, %v1016
    %v1018 = vpop.f32.mrf.mxu0
    %1019 = vdwg.mxu0
    %1020 = vmatprep.subr.mxu0 0.0
    %1021 = vmatpush1.msra.mxu0 0.0
    %1022 = vmatprep.subr.mxu0 0.0
    %1023 = vmatpush1.msra.mxu0 0.0
    %1024 = vmatprep.subr.mxu0 0.0
    %1025 = vmatpush1.msra.mxu0 0.0
    %1026 = vmatprep.subr.mxu0 0.0
    %1027 = vmatpush1.msra.mxu0 0.0
    %1028 = vmatprep.subr.mxu0 0.0
    %1029 = vmatpush1.msra.mxu0 0.0
    %1030 = vmatprep.subr.mxu0 0.0
    %1031 = vmatpush1.msra.mxu0 0.0
    %1032 = vmatprep.subr.mxu0 0.0
    %1033 = vmatpush1.msra.mxu0 0.0
    %1034 = vmatprep.subr.mxu0 0.0
    %1035 = vmatpush1.msra.mxu0 0.0
    %1036 = vmatprep.subr.mxu0 0.0
    %1037 = vmatpush1.msra.mxu0 0.0
    %1038 = vmatprep.subr.mxu0 0.0
    %1039 = vmatpush1.msra.mxu0 0.0
    %1040 = vmatprep.subr.mxu0 0.0
    %1041 = vmatpush1.msra.mxu0 0.0
    %1042 = vmatprep.subr.mxu0 0.0
    %1043 = vmatpush1.msra.mxu0 0.0
    %1044 = vmatprep.subr.mxu0 0.0
    %v1045 = vand.u32 %v739, 4294901760
    %1046 = vmatpush1.msra.mxu0 %v1045
    %1047 = vmatprep.subr.mxu0 0.0
    %v1048 = vand.u32 %v738, 4294901760
    %1049 = vmatpush1.msra.mxu0 %v1048
    %1050 = vmatprep.subr.mxu0 0.0
    %v1051 = vand.u32 %v737, 4294901760
    %1052 = vmatpush1.msra.mxu0 %v1051
    %1053 = vmatprep.subr.mxu0 0.0
    %v1054 = vand.u32 %v736, 4294901760
    %1055 = vmatpush1.msra.mxu0 %v1054
    %1056 = vmatprep.subr.mxu0 0.0
    %1057 = vmatpush2.msra.mxu0 0.0
    %1058 = vmatprep.subr.mxu0 0.0
    %1059 = vmatpush2.msra.mxu0 0.0
    %1060 = vmatprep.subr.mxu0 0.0
    %1061 = vmatpush2.msra.mxu0 0.0
    %1062 = vmatprep.subr.mxu0 0.0
    %1063 = vmatpush2.msra.mxu0 0.0
    %1064 = vmatprep.subr.mxu0 0.0
    %1065 = vmatpush2.msra.mxu0 0.0
    %1066 = vmatprep.subr.mxu0 0.0
    %1067 = vmatpush2.msra.mxu0 0.0
    %1068 = vmatprep.subr.mxu0 0.0
    %1069 = vmatpush2.msra.mxu0 0.0
    %1070 = vmatprep.subr.mxu0 0.0
    %1071 = vmatpush2.msra.mxu0 0.0
    %1072 = vmatprep.subr.mxu0 0.0
    %1073 = vmatpush2.msra.mxu0 0.0
    %1074 = vmatprep.subr.mxu0 0.0
    %1075 = vmatpush2.msra.mxu0 0.0
    %1076 = vmatprep.subr.mxu0 0.0
    %1077 = vmatpush2.msra.mxu0 0.0
    %1078 = vmatprep.subr.mxu0 0.0
    %1079 = vmatpush2.msra.mxu0 0.0
    %1080 = vmatprep.subr.mxu0 0.0
    %1081 = vmatpush2.msra.mxu0 0.0
    %1082 = vmatprep.subr.mxu0 0.0
    %1083 = vmatpush2.msra.mxu0 0.0
    %1084 = vmatprep.subr.mxu0 0.0
    %1085 = vmatpush2.msra.mxu0 0.0
    %1086 = vmatprep.subr.mxu0 0.0
    %1087 = vmatpush2.msra.mxu0 0.0
    %1088 = vmatprep.mubr.f32.mxu0 0.0
    %v1089 = vand.u32 %v742, 4294901760
    %v1090 = vsub.f32 %v742, %v1089
    %v1091 = vand.u32 %v1090, 4294901760
    %1092 = vmatmul.mubr.f32.gmra.mxu0 %v1091
    %v1093 = vpop.f32.mrf.mxu0
    %v1094 = vadd.f32 %v1010, %v1093
    %v1095 = vpop.f32.mrf.mxu0
    %1096 = vmatprep.mubr.f32.mxu0 0.0
    %v1097 = vand.u32 %v745, 4294901760
    %v1098 = vsub.f32 %v745, %v1097
    %v1099 = vand.u32 %v1098, 4294901760
    %1100 = vmatmul.mubr.f32.gmra.mxu0 %v1099
    %v1101 = vpop.f32.mrf.mxu0
    %v1102 = vadd.f32 %v1017, %v1101
    %v1103 = vpop.f32.mrf.mxu0
    %1104 = vdwg.mxu0
    %1105 = vmatprep.subr.mxu0 0.0
    %1106 = vmatpush1.msra.mxu0 0.0
    %1107 = vmatprep.subr.mxu0 0.0
    %1108 = vmatpush1.msra.mxu0 0.0
    %1109 = vmatprep.subr.mxu0 0.0
    %1110 = vmatpush1.msra.mxu0 0.0
    %1111 = vmatprep.subr.mxu0 0.0
    %1112 = vmatpush1.msra.mxu0 0.0
    %1113 = vmatprep.subr.mxu0 0.0
    %1114 = vmatpush1.msra.mxu0 0.0
    %1115 = vmatprep.subr.mxu0 0.0
    %1116 = vmatpush1.msra.mxu0 0.0
    %1117 = vmatprep.subr.mxu0 0.0
    %1118 = vmatpush1.msra.mxu0 0.0
    %1119 = vmatprep.subr.mxu0 0.0
    %1120 = vmatpush1.msra.mxu0 0.0
    %1121 = vmatprep.subr.mxu0 0.0
    %1122 = vmatpush1.msra.mxu0 0.0
    %1123 = vmatprep.subr.mxu0 0.0
    %1124 = vmatpush1.msra.mxu0 0.0
    %1125 = vmatprep.subr.mxu0 0.0
    %1126 = vmatpush1.msra.mxu0 0.0
    %1127 = vmatprep.subr.mxu0 0.0
    %1128 = vmatpush1.msra.mxu0 0.0
    %1129 = vmatprep.subr.mxu0 0.0
    %v1130 = vand.u32 %v739, 4294901760
    %v1131 = vsub.f32 %v739, %v1130
    %v1132 = vand.u32 %v1131, 4294901760
    %1133 = vmatpush1.msra.mxu0 %v1132
    %1134 = vmatprep.subr.mxu0 0.0
    %v1135 = vand.u32 %v738, 4294901760
    %v1136 = vsub.f32 %v738, %v1135
    %v1137 = vand.u32 %v1136, 4294901760
    %1138 = vmatpush1.msra.mxu0 %v1137
    %1139 = vmatprep.subr.mxu0 0.0
    %v1140 = vand.u32 %v737, 4294901760
    %v1141 = vsub.f32 %v737, %v1140
    %v1142 = vand.u32 %v1141, 4294901760
    %1143 = vmatpush1.msra.mxu0 %v1142
    %1144 = vmatprep.subr.mxu0 0.0
    %v1145 = vand.u32 %v736, 4294901760
    %v1146 = vsub.f32 %v736, %v1145
    %v1147 = vand.u32 %v1146, 4294901760
    %1148 = vmatpush1.msra.mxu0 %v1147
    %1149 = vmatprep.subr.mxu0 0.0
    %1150 = vmatpush2.msra.mxu0 0.0
    %1151 = vmatprep.subr.mxu0 0.0
    %1152 = vmatpush2.msra.mxu0 0.0
    %1153 = vmatprep.subr.mxu0 0.0
    %1154 = vmatpush2.msra.mxu0 0.0
    %1155 = vmatprep.subr.mxu0 0.0
    %1156 = vmatpush2.msra.mxu0 0.0
    %1157 = vmatprep.subr.mxu0 0.0
    %1158 = vmatpush2.msra.mxu0 0.0
    %1159 = vmatprep.subr.mxu0 0.0
    %1160 = vmatpush2.msra.mxu0 0.0
    %1161 = vmatprep.subr.mxu0 0.0
    %1162 = vmatpush2.msra.mxu0 0.0
    %1163 = vmatprep.subr.mxu0 0.0
    %1164 = vmatpush2.msra.mxu0 0.0
    %1165 = vmatprep.subr.mxu0 0.0
    %1166 = vmatpush2.msra.mxu0 0.0
    %1167 = vmatprep.subr.mxu0 0.0
    %1168 = vmatpush2.msra.mxu0 0.0
    %1169 = vmatprep.subr.mxu0 0.0
    %1170 = vmatpush2.msra.mxu0 0.0
    %1171 = vmatprep.subr.mxu0 0.0
    %1172 = vmatpush2.msra.mxu0 0.0
    %1173 = vmatprep.subr.mxu0 0.0
    %1174 = vmatpush2.msra.mxu0 0.0
    %1175 = vmatprep.subr.mxu0 0.0
    %1176 = vmatpush2.msra.mxu0 0.0
    %1177 = vmatprep.subr.mxu0 0.0
    %1178 = vmatpush2.msra.mxu0 0.0
    %1179 = vmatprep.subr.mxu0 0.0
    %1180 = vmatpush2.msra.mxu0 0.0
    %1181 = vmatprep.mubr.f32.mxu0 0.0
    %v1182 = vand.u32 %v742, 4294901760
    %1183 = vmatmul.mubr.f32.gmra.mxu0 %v1182
    %v1184 = vpop.f32.mrf.mxu0
    %v1185 = vadd.f32 %v1094, %v1184
    %v1186 = vpop.f32.mrf.mxu0
    %1187 = vmatprep.mubr.f32.mxu0 0.0
    %v1188 = vand.u32 %v745, 4294901760
    %1189 = vmatmul.mubr.f32.gmra.mxu0 %v1188
    %v1190 = vpop.f32.mrf.mxu0
    %v1191 = vadd.f32 %v1102, %v1190
    %v1192 = vpop.f32.mrf.mxu0
    %1193 = vdwg.mxu0
    %1194 = vmatprep.subr.mxu0 0.0
    %1195 = vmatpush1.msra.mxu0 0.0
    %1196 = vmatprep.subr.mxu0 0.0
    %1197 = vmatpush1.msra.mxu0 0.0
    %1198 = vmatprep.subr.mxu0 0.0
    %1199 = vmatpush1.msra.mxu0 0.0
    %1200 = vmatprep.subr.mxu0 0.0
    %1201 = vmatpush1.msra.mxu0 0.0
    %1202 = vmatprep.subr.mxu0 0.0
    %1203 = vmatpush1.msra.mxu0 0.0
    %1204 = vmatprep.subr.mxu0 0.0
    %1205 = vmatpush1.msra.mxu0 0.0
    %1206 = vmatprep.subr.mxu0 0.0
    %1207 = vmatpush1.msra.mxu0 0.0
    %1208 = vmatprep.subr.mxu0 0.0
    %1209 = vmatpush1.msra.mxu0 0.0
    %1210 = vmatprep.subr.mxu0 0.0
    %1211 = vmatpush1.msra.mxu0 0.0
    %1212 = vmatprep.subr.mxu0 0.0
    %1213 = vmatpush1.msra.mxu0 0.0
    %1214 = vmatprep.subr.mxu0 0.0
    %1215 = vmatpush1.msra.mxu0 0.0
    %1216 = vmatprep.subr.mxu0 0.0
    %1217 = vmatpush1.msra.mxu0 0.0
    %1218 = vmatprep.subr.mxu0 0.0
    %v1219 = vand.u32 %v739, 4294901760
    %1220 = vmatpush1.msra.mxu0 %v1219
    %1221 = vmatprep.subr.mxu0 0.0
    %v1222 = vand.u32 %v738, 4294901760
    %1223 = vmatpush1.msra.mxu0 %v1222
    %1224 = vmatprep.subr.mxu0 0.0
    %v1225 = vand.u32 %v737, 4294901760
    %1226 = vmatpush1.msra.mxu0 %v1225
    %1227 = vmatprep.subr.mxu0 0.0
    %v1228 = vand.u32 %v736, 4294901760
    %1229 = vmatpush1.msra.mxu0 %v1228
    %1230 = vmatprep.subr.mxu0 0.0
    %1231 = vmatpush2.msra.mxu0 0.0
    %1232 = vmatprep.subr.mxu0 0.0
    %1233 = vmatpush2.msra.mxu0 0.0
    %1234 = vmatprep.subr.mxu0 0.0
    %1235 = vmatpush2.msra.mxu0 0.0
    %1236 = vmatprep.subr.mxu0 0.0
    %1237 = vmatpush2.msra.mxu0 0.0
    %1238 = vmatprep.subr.mxu0 0.0
    %1239 = vmatpush2.msra.mxu0 0.0
    %1240 = vmatprep.subr.mxu0 0.0
    %1241 = vmatpush2.msra.mxu0 0.0
    %1242 = vmatprep.subr.mxu0 0.0
    %1243 = vmatpush2.msra.mxu0 0.0
    %1244 = vmatprep.subr.mxu0 0.0
    %1245 = vmatpush2.msra.mxu0 0.0
    %1246 = vmatprep.subr.mxu0 0.0
    %1247 = vmatpush2.msra.mxu0 0.0
    %1248 = vmatprep.subr.mxu0 0.0
    %1249 = vmatpush2.msra.mxu0 0.0
    %1250 = vmatprep.subr.mxu0 0.0
    %1251 = vmatpush2.msra.mxu0 0.0
    %1252 = vmatprep.subr.mxu0 0.0
    %1253 = vmatpush2.msra.mxu0 0.0
    %1254 = vmatprep.subr.mxu0 0.0
    %1255 = vmatpush2.msra.mxu0 0.0
    %1256 = vmatprep.subr.mxu0 0.0
    %1257 = vmatpush2.msra.mxu0 0.0
    %1258 = vmatprep.subr.mxu0 0.0
    %1259 = vmatpush2.msra.mxu0 0.0
    %1260 = vmatprep.subr.mxu0 0.0
    %1261 = vmatpush2.msra.mxu0 0.0
    %1262 = vmatprep.mubr.f32.mxu0 0.0
    %v1263 = vand.u32 %v742, 4294901760
    %1264 = vmatmul.mubr.f32.gmra.mxu0 %v1263
    %v1265 = vpop.f32.mrf.mxu0
    %v1266 = vadd.f32 %v1185, %v1265
    %v1267 = vpop.f32.mrf.mxu0
    %1268 = vmatprep.mubr.f32.mxu0 0.0
    %v1269 = vand.u32 %v745, 4294901760
    %1270 = vmatmul.mubr.f32.gmra.mxu0 %v1269
    %v1271 = vpop.f32.mrf.mxu0
    %v1272 = vadd.f32 %v1191, %v1271
    %v1273 = vpop.f32.mrf.mxu0
    %1274 = vdwg.mxu0
    %1275 = vst [vmem:[#allocation2] sm:$0xff] %v1266
    %1276 = vst [vmem:[#allocation2 + $0x8] sm:$0xff] %v1272
    // Predicated region
    $region18: #{tpu_custom_call.1} parent=1 // pred_check
      _
    $region19: #{tpu_custom_call.1} parent=1 // pred_check_branch
      %1278 = sbr.rel (0) target = $region21
    $region20: #{tpu_custom_call.1} parent=1 // pred_region
      %s1280 = ssub.s32 256, 256
      %1281 = vsyncadd [#allocation3], %s1280
      %s1282 = sshll.u32 [#allocation2], 4
      %s1283 = int_to_ptr.vmem [resolvable:$true] %s1282
      %1288 = dma.vmem_to_hbm [thread:$0]  %s1283, 256, %s4, [#allocation3], 128, 128, 8
    $region21: #{tpu_custom_call.1} parent=1 // pred_fallthru
      _
    // Predicated region
    $region22: #{tpu_custom_call.1} parent=1 // pred_check
      _
    $region23: #{tpu_custom_call.1} parent=1 // pred_check_branch
      %1290 = sbr.rel (0) target = $region25
    $region24: #{tpu_custom_call.1} parent=1 // pred_region
      %1291 = dma.done [#allocation3], 256
    $region25: #{tpu_custom_call.1} parent=1 // pred_fallthru
      _
    %1292 = vsyncpa [#allocation3], 1

</llo_original>
